<compile_context>
chip_gen: v5e
topology: v5e:2x2
jax: 0.10.0
libtpu: 0.0.40
codegen_flags: <defaults>
</compile_context>

<pallas_src>
import jax
import jax.numpy as jnp
from jax import lax
from jax.experimental import pallas as pl
from jax.experimental.pallas import tpu as pltpu


def _round_up(x: int, m: int) -> int:
    return ((x + m - 1) // m) * m


# ----------------------------------------------------------------------------
# Resident-table path: whole (V, D) table lives in VMEM; gather each row with
# a scalar-indexed dynamic slice (ids come from SMEM via scalar prefetch).
# ----------------------------------------------------------------------------
def _make_resident_kernel(vocab_size: int, block_rows: int, has_dropout: bool):
    def kernel(ids_smem, *refs):
        if has_dropout:
            scale_ref, table_ref, out_ref = refs
        else:
            table_ref, out_ref = refs
        base = pl.program_id(0) * block_rows

        def gather_row(r, carry):
            wid = ids_smem[base + r]
            valid = jnp.logical_and(wid >= 0, wid < vocab_size)
            safe = jnp.clip(wid, 0, vocab_size - 1)
            row = table_ref[pl.ds(safe, 1), :].astype(jnp.float32)   # (1, D)
            row = jnp.where(valid, row, 0.0)                         # OOV -> 0
            out_ref[pl.ds(r, 1), :] = row.astype(out_ref.dtype)
            return carry

        lax.fori_loop(0, block_rows, gather_row, 0, unroll=8)

        if has_dropout:
            out_ref[...] = (out_ref[...].astype(jnp.float32)
                            * scale_ref[...]).astype(out_ref.dtype)

    return kernel


# ----------------------------------------------------------------------------
# Large-vocab path: table stays in HBM (memory_space=pl.ANY); ids are scalar-
# prefetched into SMEM and block_rows concurrent per-row DMAs gather the block
# into a VMEM scratch.  One coalesced byte-count wait covers all row copies.
# ----------------------------------------------------------------------------
def _make_dma_kernel(vocab_size: int, block_rows: int, has_dropout: bool):
    def kernel(ids_smem, *refs):
        if has_dropout:
            scale_ref, ids_ref, table_hbm, out_ref, buf, sem = refs
        else:
            ids_ref, table_hbm, out_ref, buf, sem = refs
        base = pl.program_id(0) * block_rows

        # Issue block_rows row-gather DMAs; all in flight simultaneously.
        # Unrolled so address math co-issues with descriptor pushes.
        def issue(r, carry):
            wid = ids_smem[base + r]
            safe = jnp.clip(wid, 0, vocab_size - 1)    # keep the DMA in-bounds
            pltpu.make_async_copy(table_hbm.at[safe], buf.at[r], sem).start()
            return carry

        lax.fori_loop(0, block_rows, issue, 0, unroll=8)

        # Single coalesced wait sized for the whole block: every row copy has
        # identical byte count and signals the same semaphore, so one wait for
        # block_rows * row_bytes covers them all.  The source ref is used for
        # sizing only (fallback to `buf` keeps the descriptor in bounds when
        # the vocab is smaller than the block, e.g. in tests).
        if block_rows <= vocab_size:
            size_src = table_hbm.at[pl.ds(0, block_rows)]
        else:
            size_src = buf
        pltpu.make_async_copy(size_src, buf, sem).wait()

        ids = ids_ref[...]                                            # (TM, 1)
        valid = jnp.logical_and(ids >= 0, ids < vocab_size)
        rows = buf[...].astype(jnp.float32)                           # (TM, D)
        if has_dropout:
            rows = rows * scale_ref[...]
        out_ref[...] = jnp.where(valid, rows, 0.0).astype(out_ref.dtype)

    return kernel


def fasttext_embed(table: jax.Array, word_ids: jax.Array, *,
                   dropout_p: float = 0.0, seed: int = 0,
                   block_rows: int = 256,
                   resident_bytes_limit: int = 8 * 1024 * 1024) -> jax.Array:
    """Gather embedding rows for `word_ids`; out-of-vocab ids give zero vectors.

    table    : (V, D) float embedding table
    word_ids : (N,)   int32 word indices (may be out of range -> zeros)
    returns  : (N, D) table.dtype, with inverted dropout applied if dropout_p>0
    """
    V, D = table.shape
    N = int(word_ids.shape[0])
    word_ids = word_ids.astype(jnp.int32)

    # Batch TM words per grid step; TM multiple of 8 keeps stores sublane-dense.
    block_rows = max(8, _round_up(block_rows, 8))
    tm = min(block_rows, _round_up(max(N, 1), 8))
    n_pad = _round_up(max(N, 1), tm)
    grid = (n_pad // tm,)
    ids_padded = jnp.full((n_pad,), -1, dtype=jnp.int32).at[:N].set(word_ids)

    has_dropout = dropout_p > 0.0
    extra_inputs = []
    if has_dropout:
        # Host-side inverted-dropout scale: keep ? 1/(1-p) : 0 (matches
        # nn.Dropout in training mode).  Avoids on-device PRNG primitives.
        if dropout_p >= 1.0:
            scale = jnp.zeros((n_pad, D), jnp.float32)
        else:
            keep = jax.random.bernoulli(jax.random.PRNGKey(seed),
                                        p=1.0 - dropout_p, shape=(n_pad, D))
            scale = keep.astype(jnp.float32) * (1.0 / (1.0 - dropout_p))
        extra_inputs.append(scale)

    table_bytes = V * D * table.dtype.itemsize
    use_resident = table_bytes <= resident_bytes_limit

    cparams = pltpu.CompilerParams(
        dimension_semantics=("parallel",),
        vmem_limit_bytes=32 * 1024 * 1024,
    )

    if use_resident:
        kernel = _make_resident_kernel(V, tm, has_dropout)
        in_specs = []
        if has_dropout:
            in_specs.append(pl.BlockSpec((tm, D), lambda i, ids: (i, 0)))
        in_specs.append(pl.BlockSpec((V, D), lambda i, ids: (0, 0)))  # resident table
        grid_spec = pltpu.PrefetchScalarGridSpec(
            num_scalar_prefetch=1,                       # ids -> SMEM
            grid=grid,
            in_specs=in_specs,
            out_specs=pl.BlockSpec((tm, D), lambda i, ids: (i, 0)),
        )
        out = pl.pallas_call(
            kernel,
            out_shape=jax.ShapeDtypeStruct((n_pad, D), table.dtype),
            grid_spec=grid_spec,
            compiler_params=cparams,
        )(ids_padded, *extra_inputs, table)
    else:
        kernel = _make_dma_kernel(V, tm, has_dropout)
        ids_2d = ids_padded.reshape(n_pad, 1)
        in_specs = []
        if has_dropout:
            in_specs.append(pl.BlockSpec((tm, D), lambda i, ids: (i, 0)))
        in_specs.append(pl.BlockSpec((tm, 1), lambda i, ids: (i, 0)))  # ids (mask)
        in_specs.append(pl.BlockSpec(memory_space=pl.ANY))             # table in HBM
        grid_spec = pltpu.PrefetchScalarGridSpec(
            num_scalar_prefetch=1,                       # ids -> SMEM (addressing)
            grid=grid,
            in_specs=in_specs,
            out_specs=pl.BlockSpec((tm, D), lambda i, ids: (i, 0)),
            scratch_shapes=[
                pltpu.VMEM((tm, D), table.dtype),        # gather destination
                pltpu.SemaphoreType.DMA,                 # shared by all row copies
            ],
        )
        out = pl.pallas_call(
            kernel,
            out_shape=jax.ShapeDtypeStruct((n_pad, D), table.dtype),
            grid_spec=grid_spec,
            compiler_params=cparams,
        )(ids_padded, *extra_inputs, ids_2d, table)

    return out[:N]


if __name__ == "__main__":
    key = jax.random.PRNGKey(0)
    k_tab, _ = jax.random.split(key)

    VOCAB = 64          # number of words kept by _load_vectors (limit)
    EMB_DIM = 128       # `dim` from the fastText file header
    N_WORDS = 10        # number of words passed to forwards()

    # Deterministic synthetic "fastText" table (stands in for the file load).
    table = jax.random.normal(k_tab, (VOCAB, EMB_DIM), dtype=jnp.float32)

    # Word ids; the last two are out-of-vocabulary -> must come back as zeros.
    word_ids = jnp.array([0, 3, 17, 42, 63, 5, 12, 7, -1, VOCAB + 7],
                         dtype=jnp.int32)

    in_vocab = (word_ids >= 0) & (word_ids < VOCAB)
    ref = jnp.where(in_vocab[:, None],
                    table[jnp.clip(word_ids, 0, VOCAB - 1)],
                    jnp.zeros((N_WORDS, EMB_DIM), jnp.float32))

    # 1) Resident-table path (dynamic-slice gather), multi-step grid (tm=8).
    out_res = jax.block_until_ready(
        fasttext_embed(table, word_ids, dropout_p=0.0, block_rows=8))
    assert out_res.shape == (N_WORDS, EMB_DIM)
    assert jnp.array_equal(out_res, ref), "resident path mismatch"
    assert bool(jnp.all(out_res[8:] == 0.0)), "OOV rows must be exactly zero"

    # 2) Manual-DMA gather path (forced by a zero resident-table budget).
    out_dma = jax.block_until_ready(
        fasttext_embed(table, word_ids, dropout_p=0.0, block_rows=8,
                       resident_bytes_limit=0))
    assert out_dma.shape == (N_WORDS, EMB_DIM)
    assert jnp.array_equal(out_dma, ref), "DMA gather path mismatch"

    # 3) Dropout sanity: every element is 0 or the survivor-scaled table entry,
    #    and both dropped and kept elements occur among in-vocab rows.
    p = 0.5
    out_do = jax.block_until_ready(
        fasttext_embed(table, word_ids, dropout_p=p, seed=123))
    scaled = ref / (1.0 - p)
    ok = (out_do == 0.0) | jnp.isclose(out_do, scaled, rtol=1e-5, atol=1e-5)
    assert bool(jnp.all(ok)), "dropout produced unexpected values"
    valid_part = out_do[:8]
    assert bool(jnp.any(valid_part == 0.0)), "dropout dropped nothing"
    assert bool(jnp.any(valid_part != 0.0)), "dropout dropped everything"
    assert bool(jnp.all(out_do[8:] == 0.0)), "OOV rows must stay zero under dropout"

    print("KERNEL_OK")
</pallas_src>

<mosaic_0001>
module attributes {stable_mosaic.version = 11 : i64} {
  func.func @kernel(%arg0: i32, %arg1: memref<16xi32, #tpu.memory_space<smem>>, %arg2: memref<64x128xf32, #tpu.memory_space<vmem>>, %arg3: memref<8x128xf32, #tpu.memory_space<vmem>>) attributes {dimension_semantics = [#tpu.dimension_semantics<parallel>], iteration_bounds = array<i64: 2>, scalar_prefetch = 1 : i64, scratch_operands = 0 : i64, tpu.core_type = #tpu.core_type<tc>, window_params = [{pipeline_mode = #tpu.pipeline_mode<synchronous>, transform_indices = @transform_0, window_bounds = array<i64: 64, 128>}, {transform_indices = @transform_1, window_bounds = array<i64: 8, 128>}]} {
    %c8_i32 = arith.constant 8 : i32
    %0 = arith.muli %arg0, %c8_i32 : i32
    %c0_i32 = arith.constant 0 : i32
    %1 = arith.addi %0, %c0_i32 : i32
    %2 = arith.index_cast %1 : i32 to index
    %3 = memref.load %arg1[%2] : memref<16xi32, #tpu.memory_space<smem>>
    %c0_i32_0 = arith.constant 0 : i32
    %4 = arith.cmpi sge, %3, %c0_i32_0 : i32
    %c64_i32 = arith.constant 64 : i32
    %5 = arith.cmpi slt, %3, %c64_i32 : i32
    %6 = arith.andi %4, %5 : i1
    %c0_i32_1 = arith.constant 0 : i32
    %c63_i32 = arith.constant 63 : i32
    %7 = arith.maxsi %c0_i32_1, %3 : i32
    %8 = arith.minsi %c63_i32, %7 : i32
    %9 = arith.index_cast %8 : i32 to index
    %c0 = arith.constant 0 : index
    %10 = vector.load %arg2[%9, %c0] : memref<64x128xf32, #tpu.memory_space<vmem>>, vector<1x128xf32>
    %cst = arith.constant 0.000000e+00 : f32
    %11 = vector.broadcast %cst : f32 to vector<1x128xf32>
    %12 = arith.select %6, %10, %11 : vector<1x128xf32>
    %13 = arith.index_cast %c0_i32 : i32 to index
    %c0_2 = arith.constant 0 : index
    %14 = vector.load %arg3[%13, %c0_2] : memref<8x128xf32, #tpu.memory_space<vmem>>, vector<1x128xf32>
    tpu.vector_store %arg3[%13, %c0_2], %12 {strides = array<i32>} : memref<8x128xf32, #tpu.memory_space<vmem>>, vector<1x128xf32>,
    %c1_i32 = arith.constant 1 : i32
    %15 = arith.addi %0, %c1_i32 : i32
    %16 = arith.index_cast %15 : i32 to index
    %17 = memref.load %arg1[%16] : memref<16xi32, #tpu.memory_space<smem>>
    %c0_i32_3 = arith.constant 0 : i32
    %18 = arith.cmpi sge, %17, %c0_i32_3 : i32
    %c64_i32_4 = arith.constant 64 : i32
    %19 = arith.cmpi slt, %17, %c64_i32_4 : i32
    %20 = arith.andi %18, %19 : i1
    %c0_i32_5 = arith.constant 0 : i32
    %c63_i32_6 = arith.constant 63 : i32
    %21 = arith.maxsi %c0_i32_5, %17 : i32
    %22 = arith.minsi %c63_i32_6, %21 : i32
    %23 = arith.index_cast %22 : i32 to index
    %c0_7 = arith.constant 0 : index
    %24 = vector.load %arg2[%23, %c0_7] : memref<64x128xf32, #tpu.memory_space<vmem>>, vector<1x128xf32>
    %cst_8 = arith.constant 0.000000e+00 : f32
    %25 = vector.broadcast %cst_8 : f32 to vector<1x128xf32>
    %26 = arith.select %20, %24, %25 : vector<1x128xf32>
    %27 = arith.index_cast %c1_i32 : i32 to index
    %c0_9 = arith.constant 0 : index
    %28 = vector.load %arg3[%27, %c0_9] : memref<8x128xf32, #tpu.memory_space<vmem>>, vector<1x128xf32>
    tpu.vector_store %arg3[%27, %c0_9], %26 {strides = array<i32>} : memref<8x128xf32, #tpu.memory_space<vmem>>, vector<1x128xf32>,
    %c2_i32 = arith.constant 2 : i32
    %29 = arith.addi %0, %c2_i32 : i32
    %30 = arith.index_cast %29 : i32 to index
    %31 = memref.load %arg1[%30] : memref<16xi32, #tpu.memory_space<smem>>
    %c0_i32_10 = arith.constant 0 : i32
    %32 = arith.cmpi sge, %31, %c0_i32_10 : i32
    %c64_i32_11 = arith.constant 64 : i32
    %33 = arith.cmpi slt, %31, %c64_i32_11 : i32
    %34 = arith.andi %32, %33 : i1
    %c0_i32_12 = arith.constant 0 : i32
    %c63_i32_13 = arith.constant 63 : i32
    %35 = arith.maxsi %c0_i32_12, %31 : i32
    %36 = arith.minsi %c63_i32_13, %35 : i32
    %37 = arith.index_cast %36 : i32 to index
    %c0_14 = arith.constant 0 : index
    %38 = vector.load %arg2[%37, %c0_14] : memref<64x128xf32, #tpu.memory_space<vmem>>, vector<1x128xf32>
    %cst_15 = arith.constant 0.000000e+00 : f32
    %39 = vector.broadcast %cst_15 : f32 to vector<1x128xf32>
    %40 = arith.select %34, %38, %39 : vector<1x128xf32>
    %41 = arith.index_cast %c2_i32 : i32 to index
    %c0_16 = arith.constant 0 : index
    %42 = vector.load %arg3[%41, %c0_16] : memref<8x128xf32, #tpu.memory_space<vmem>>, vector<1x128xf32>
    tpu.vector_store %arg3[%41, %c0_16], %40 {strides = array<i32>} : memref<8x128xf32, #tpu.memory_space<vmem>>, vector<1x128xf32>,
    %c3_i32 = arith.constant 3 : i32
    %43 = arith.addi %0, %c3_i32 : i32
    %44 = arith.index_cast %43 : i32 to index
    %45 = memref.load %arg1[%44] : memref<16xi32, #tpu.memory_space<smem>>
    %c0_i32_17 = arith.constant 0 : i32
    %46 = arith.cmpi sge, %45, %c0_i32_17 : i32
    %c64_i32_18 = arith.constant 64 : i32
    %47 = arith.cmpi slt, %45, %c64_i32_18 : i32
    %48 = arith.andi %46, %47 : i1
    %c0_i32_19 = arith.constant 0 : i32
    %c63_i32_20 = arith.constant 63 : i32
    %49 = arith.maxsi %c0_i32_19, %45 : i32
    %50 = arith.minsi %c63_i32_20, %49 : i32
    %51 = arith.index_cast %50 : i32 to index
    %c0_21 = arith.constant 0 : index
    %52 = vector.load %arg2[%51, %c0_21] : memref<64x128xf32, #tpu.memory_space<vmem>>, vector<1x128xf32>
    %cst_22 = arith.constant 0.000000e+00 : f32
    %53 = vector.broadcast %cst_22 : f32 to vector<1x128xf32>
    %54 = arith.select %48, %52, %53 : vector<1x128xf32>
    %55 = arith.index_cast %c3_i32 : i32 to index
    %c0_23 = arith.constant 0 : index
    %56 = vector.load %arg3[%55, %c0_23] : memref<8x128xf32, #tpu.memory_space<vmem>>, vector<1x128xf32>
    tpu.vector_store %arg3[%55, %c0_23], %54 {strides = array<i32>} : memref<8x128xf32, #tpu.memory_space<vmem>>, vector<1x128xf32>,
    %c4_i32 = arith.constant 4 : i32
    %57 = arith.addi %0, %c4_i32 : i32
    %58 = arith.index_cast %57 : i32 to index
    %59 = memref.load %arg1[%58] : memref<16xi32, #tpu.memory_space<smem>>
    %c0_i32_24 = arith.constant 0 : i32
    %60 = arith.cmpi sge, %59, %c0_i32_24 : i32
    %c64_i32_25 = arith.constant 64 : i32
    %61 = arith.cmpi slt, %59, %c64_i32_25 : i32
    %62 = arith.andi %60, %61 : i1
    %c0_i32_26 = arith.constant 0 : i32
    %c63_i32_27 = arith.constant 63 : i32
    %63 = arith.maxsi %c0_i32_26, %59 : i32
    %64 = arith.minsi %c63_i32_27, %63 : i32
    %65 = arith.index_cast %64 : i32 to index
    %c0_28 = arith.constant 0 : index
    %66 = vector.load %arg2[%65, %c0_28] : memref<64x128xf32, #tpu.memory_space<vmem>>, vector<1x128xf32>
    %cst_29 = arith.constant 0.000000e+00 : f32
    %67 = vector.broadcast %cst_29 : f32 to vector<1x128xf32>
    %68 = arith.select %62, %66, %67 : vector<1x128xf32>
    %69 = arith.index_cast %c4_i32 : i32 to index
    %c0_30 = arith.constant 0 : index
    %70 = vector.load %arg3[%69, %c0_30] : memref<8x128xf32, #tpu.memory_space<vmem>>, vector<1x128xf32>
    tpu.vector_store %arg3[%69, %c0_30], %68 {strides = array<i32>} : memref<8x128xf32, #tpu.memory_space<vmem>>, vector<1x128xf32>,
    %c5_i32 = arith.constant 5 : i32
    %71 = arith.addi %0, %c5_i32 : i32
    %72 = arith.index_cast %71 : i32 to index
    %73 = memref.load %arg1[%72] : memref<16xi32, #tpu.memory_space<smem>>
    %c0_i32_31 = arith.constant 0 : i32
    %74 = arith.cmpi sge, %73, %c0_i32_31 : i32
    %c64_i32_32 = arith.constant 64 : i32
    %75 = arith.cmpi slt, %73, %c64_i32_32 : i32
    %76 = arith.andi %74, %75 : i1
    %c0_i32_33 = arith.constant 0 : i32
    %c63_i32_34 = arith.constant 63 : i32
    %77 = arith.maxsi %c0_i32_33, %73 : i32
    %78 = arith.minsi %c63_i32_34, %77 : i32
    %79 = arith.index_cast %78 : i32 to index
    %c0_35 = arith.constant 0 : index
    %80 = vector.load %arg2[%79, %c0_35] : memref<64x128xf32, #tpu.memory_space<vmem>>, vector<1x128xf32>
    %cst_36 = arith.constant 0.000000e+00 : f32
    %81 = vector.broadcast %cst_36 : f32 to vector<1x128xf32>
    %82 = arith.select %76, %80, %81 : vector<1x128xf32>
    %83 = arith.index_cast %c5_i32 : i32 to index
    %c0_37 = arith.constant 0 : index
    %84 = vector.load %arg3[%83, %c0_37] : memref<8x128xf32, #tpu.memory_space<vmem>>, vector<1x128xf32>
    tpu.vector_store %arg3[%83, %c0_37], %82 {strides = array<i32>} : memref<8x128xf32, #tpu.memory_space<vmem>>, vector<1x128xf32>,
    %c6_i32 = arith.constant 6 : i32
    %85 = arith.addi %0, %c6_i32 : i32
    %86 = arith.index_cast %85 : i32 to index
    %87 = memref.load %arg1[%86] : memref<16xi32, #tpu.memory_space<smem>>
    %c0_i32_38 = arith.constant 0 : i32
    %88 = arith.cmpi sge, %87, %c0_i32_38 : i32
    %c64_i32_39 = arith.constant 64 : i32
    %89 = arith.cmpi slt, %87, %c64_i32_39 : i32
    %90 = arith.andi %88, %89 : i1
    %c0_i32_40 = arith.constant 0 : i32
    %c63_i32_41 = arith.constant 63 : i32
    %91 = arith.maxsi %c0_i32_40, %87 : i32
    %92 = arith.minsi %c63_i32_41, %91 : i32
    %93 = arith.index_cast %92 : i32 to index
    %c0_42 = arith.constant 0 : index
    %94 = vector.load %arg2[%93, %c0_42] : memref<64x128xf32, #tpu.memory_space<vmem>>, vector<1x128xf32>
    %cst_43 = arith.constant 0.000000e+00 : f32
    %95 = vector.broadcast %cst_43 : f32 to vector<1x128xf32>
    %96 = arith.select %90, %94, %95 : vector<1x128xf32>
    %97 = arith.index_cast %c6_i32 : i32 to index
    %c0_44 = arith.constant 0 : index
    %98 = vector.load %arg3[%97, %c0_44] : memref<8x128xf32, #tpu.memory_space<vmem>>, vector<1x128xf32>
    tpu.vector_store %arg3[%97, %c0_44], %96 {strides = array<i32>} : memref<8x128xf32, #tpu.memory_space<vmem>>, vector<1x128xf32>,
    %c7_i32 = arith.constant 7 : i32
    %99 = arith.addi %0, %c7_i32 : i32
    %100 = arith.index_cast %99 : i32 to index
    %101 = memref.load %arg1[%100] : memref<16xi32, #tpu.memory_space<smem>>
    %c0_i32_45 = arith.constant 0 : i32
    %102 = arith.cmpi sge, %101, %c0_i32_45 : i32
    %c64_i32_46 = arith.constant 64 : i32
    %103 = arith.cmpi slt, %101, %c64_i32_46 : i32
    %104 = arith.andi %102, %103 : i1
    %c0_i32_47 = arith.constant 0 : i32
    %c63_i32_48 = arith.constant 63 : i32
    %105 = arith.maxsi %c0_i32_47, %101 : i32
    %106 = arith.minsi %c63_i32_48, %105 : i32
    %107 = arith.index_cast %106 : i32 to index
    %c0_49 = arith.constant 0 : index
    %108 = vector.load %arg2[%107, %c0_49] : memref<64x128xf32, #tpu.memory_space<vmem>>, vector<1x128xf32>
    %cst_50 = arith.constant 0.000000e+00 : f32
    %109 = vector.broadcast %cst_50 : f32 to vector<1x128xf32>
    %110 = arith.select %104, %108, %109 : vector<1x128xf32>
    %111 = arith.index_cast %c7_i32 : i32 to index
    %c0_51 = arith.constant 0 : index
    %112 = vector.load %arg3[%111, %c0_51] : memref<8x128xf32, #tpu.memory_space<vmem>>, vector<1x128xf32>
    tpu.vector_store %arg3[%111, %c0_51], %110 {strides = array<i32>} : memref<8x128xf32, #tpu.memory_space<vmem>>, vector<1x128xf32>,
    %c8_i32_52 = arith.constant 8 : i32
    return
  }
  func.func @transform_0(%arg0: i32, %arg1: memref<16xi32, #tpu.memory_space<smem>>) -> (i32, i32) {
    %c0_i32 = arith.constant 0 : i32
    %c0_i32_0 = arith.constant 0 : i32
    %c0_i32_1 = arith.constant 0 : i32
    return %c0_i32, %c0_i32_0 : i32, i32
  }
  func.func @transform_1(%arg0: i32, %arg1: memref<16xi32, #tpu.memory_space<smem>>) -> (i32, i32) {
    %c0_i32 = arith.constant 0 : i32
    %c0_i32_0 = arith.constant 0 : i32
    return %arg0, %c0_i32 : i32, i32
  }
}

</mosaic_0001>

<llo_original>
// kernel: tpu_custom_call.1
$region0: #{tpu_custom_call.1}
  #allocation0 [shape = 'u32[]', space=smem, size = 0x4, offset = 0x4, fixed_abs, tag = 'smem constant byte address 0x4 - core index']
  #allocation1 [shape = 'u32[72,128]{1,0:T(1,128)}', space=vmem, size = 0x9000, scoped, tag = 'internal scratch']
  #allocation2 [shape = 's32[1]{0}', space=sflag, size = 0x4, scoped, tag = 'scoped memory for tpu_custom_call.1']
  #allocation3 [shape = 'u8[512]{0}', space=smem, size = 0x200, scoped, tag = 'prefetched SMEM operand 0']
  %s0 = inlined_call_operand.hbm [shape: s32[16], index: 0, kind: input, shape index: {}]
  %s1 = inlined_call_operand.hbm [shape: f32[64,128], index: 1, kind: input, shape index: {}]
  %s2 = inlined_call_operand.hbm [shape: f32[16,128], index: 2, kind: output, shape index: {}]
  %s3 = sld [smem:[#allocation0]]
  $region41: #{tpu_custom_call.1} parent=0
    _
  %s5 = ssub.s32 1, %s3
  %s6 = scalar_select 0, %s5, %s3
  %s8 = sshll.u32 %s0, 4
  %s9 = int_to_ptr.hbm [resolvable:$true] %s8
  %11 = dma.hbm_to_smem %s9, 16, [#allocation3], [#allocation2]
  %13 = dma.done [#allocation2], 16
  %14 = sfence
  $region1: #{tpu_custom_call.1} parent=0
    #allocation4 [shape = 'u8[32768]{0}', space=vmem, size = 0x8000, scoped, tag = 'input window, operand 1, single buffered']
    #allocation5 [shape = 's32[2]{0}', space=sflag, size = 0x8, scoped, tag = 'scoped memory for tpu_custom_call.1']
    #allocation6 [shape = 's32[2]{0}', space=sflag, size = 0x8, scoped, tag = 'scoped memory for tpu_custom_call.1']
    #allocation7 [shape = 'u8[8192]{0}', space=vmem, size = 0x2000, scoped, tag = 'output window, operand 0']
    %15 = vsyncpa [#allocation5], 0
    %16 = vsyncpa [#allocation6], 0
    %s17 = scalar_lea.sflag [#allocation6], 1
    %18 = vsyncpa %s17, 0
    loop: start=0, step=1, limit=4
    $region2: #{tpu_custom_call.1} parent=1 // loop_pre_header
      _
    $region3: #{tpu_custom_call.1} parent=1 // loop_header
      %s20 = sphi 0, %s24
      %p21 = scmp.ge.s32.totalorder %s20, 4
      %s28 = sphi 0, %s28
      %s30 = sphi 0, %s28
      %s31 = sphi 0, %s30
      %s45 = sphi 0, %s31
      %s51 = sphi 0, %s53
      %s54 = sphi 0, %s51
      %s55 = sphi 0, %s54
      %s71 = sphi 0, %s55
    $region4: #{tpu_custom_call.1} parent=1 // loop_header_branch
      %23 = sbr.rel (%p21) target = $region8
    $region5: #{tpu_custom_call.1} parent=1 // loop_body
      %s25 = ssub.s32 %s20, 1
      %s26 = ssub.s32 %s20, 2
      %s27 = sadd.s32 %s20, 1
      %s29 = sadd.s32 %s28, 1
      %p32 = scmp.eq.s32.totalorder %s20, 1
      %p33 = scmp.ne.s32.totalorder %s28, %s30
      %p34 = scmp.eq.s32.totalorder %s20, 0
      %p35 = por %p33, %p34
      %p36 = scmp.ne.s32.totalorder %s28, %s30
      %p37 = scmp.eq.s32.totalorder %s25, 1
      %p38 = por %p36, %p37
      %p39 = scmp.ne.s32.totalorder %s30, %s31
      %p40 = scmp.eq.s32.totalorder %s25, 0
      %p41 = por %p39, %p40
      %p42 = scmp.ne.s32.totalorder %s30, %s31
      %p43 = scmp.eq.s32.totalorder %s26, 1
      %p44 = por %p42, %p43
      %p46 = scmp.ne.s32.totalorder %s31, %s45
      %p47 = scmp.eq.s32.totalorder %s26, 0
      %p48 = por %p46, %p47
      %s49 = ssub.s32 %s20, %s27
      %p50 = scmp.eq.s32.totalorder %s49, 0
      %s52 = sadd.s32 %s51, 1
      %s53 = scalar_select %p50, %s51, %s52
      %p56 = pneg %p50
      %p57 = scmp.eq.s32.totalorder %s20, 1
      %p58 = por %p56, %p57
      %p59 = scmp.ne.s32.totalorder %s51, %s54
      %p60 = scmp.eq.s32.totalorder %s20, 0
      %p61 = por %p59, %p60
      %p62 = scmp.ne.s32.totalorder %s51, %s54
      %p63 = scmp.eq.s32.totalorder %s25, 1
      %p64 = por %p62, %p63
      %p65 = scmp.ne.s32.totalorder %s54, %s55
      %p66 = scmp.eq.s32.totalorder %s25, 0
      %p67 = por %p65, %p66
      %p68 = scmp.ne.s32.totalorder %s54, %s55
      %p69 = scmp.eq.s32.totalorder %s26, 1
      %p70 = por %p68, %p69
      %p72 = scmp.ne.s32.totalorder %s55, %s71
      %p73 = scmp.eq.s32.totalorder %s26, 0
      %p74 = por %p72, %p73
      %p75 = scmp.le.s32.totalorder 1, %s20
      %p76 = scmp.lt.s32.totalorder %s20, 3
      %p77 = pnand %p75, %p76
      %p78 = pneg %p77
      // Predicated region
      $region9: #{tpu_custom_call.1} parent=5 // pred_check
        _
      $region10: #{tpu_custom_call.1} parent=5 // pred_check_branch
        %80 = sbr.rel (%p77) target = $region12
      $region11: #{tpu_custom_call.1} parent=5 // pred_region
        %s81 = ssub.s32 %s20, 1
        // Predicated region
        $region13: #{tpu_custom_call.1} parent=11 // pred_check
          %p82 = pneg %p41
        $region14: #{tpu_custom_call.1} parent=11 // pred_check_branch
          %84 = sbr.rel (%p82) target = $region16
        $region15: #{tpu_custom_call.1} parent=11 // pred_region
          %86 = vsyncadd [#allocation5], 0
          %s87 = sshll.u32 %s1, 4
          %s88 = int_to_ptr.hbm [resolvable:$true] %s87
          %s89 = sshll.u32 [#allocation4], 4
          %s90 = int_to_ptr.vmem [resolvable:$true] %s89
          %95 = dma.hbm_to_vmem [thread:$0]  %s88, 1024, %s90, [#allocation5], 128, 128, 8
        $region16: #{tpu_custom_call.1} parent=11 // pred_fallthru
          _
      $region12: #{tpu_custom_call.1} parent=5 // pred_fallthru
        _
      %p96 = scmp.lt.s32.totalorder %s20, 2
      // Predicated region
      $region17: #{tpu_custom_call.1} parent=5 // pred_check
        %p97 = pneg %p96
      $region18: #{tpu_custom_call.1} parent=5 // pred_check_branch
        %99 = sbr.rel (%p97) target = $region20
      $region19: #{tpu_custom_call.1} parent=5 // pred_region
        _
      $region20: #{tpu_custom_call.1} parent=5 // pred_fallthru
        _
      %p100 = scmp.le.s32.totalorder 1, %s20
      %p101 = scmp.lt.s32.totalorder %s20, 3
      %p102 = pnand %p100, %p101
      %p103 = pneg %p102
      // Predicated region
      $region21: #{tpu_custom_call.1} parent=5 // pred_check
        _
      $region22: #{tpu_custom_call.1} parent=5 // pred_check_branch
        %105 = sbr.rel (%p102) target = $region24
      $region23: #{tpu_custom_call.1} parent=5 // pred_region
        %s106 = ssub.s32 %s20, 1
        // Predicated region
        $region25: #{tpu_custom_call.1} parent=23 // pred_check
          %p107 = pneg %p41
        $region26: #{tpu_custom_call.1} parent=23 // pred_check_branch
          %109 = sbr.rel (%p107) target = $region28
        $region27: #{tpu_custom_call.1} parent=23 // pred_region
          %111 = dma.done [#allocation5], 1024
        $region28: #{tpu_custom_call.1} parent=23 // pred_fallthru
          _
        %p112 = pneg %p41
        %p113 = pneg %p38
        %p114 = pneg %p67
        %p115 = pneg %p64
        %s116 = sand.u32 %s54, 1
        %s117 = scalar_lea.sflag [#allocation6], %s116
        %s118 = sand.u32 %s54, 1
        %s119 = smul.addr %s118, 8
        %s120 = scalar_lea.vmem [#allocation7], %s119
        %s121 = smul.u32 %s25, 8
        %s122 = sld [smem:[#allocation3 + %s121]]
        %p123 = scmp.ge.s32.totalorder %s122, 0
        %p124 = scmp.lt.s32.totalorder %s122, 64
        %p125 = pnand %p123, %p124
        %p126 = pneg %p125
        %p127 = scmp.gt.s32.totalorder %s122, 0
        %s128 = scalar_select %p127, %s122, 0
        %p129 = scmp.lt.s32.totalorder %s128, 63
        %s130 = scalar_select %p129, %s128, 63
        %s131 = scalar_lea.vmem [#allocation4], %s130
        %v132 = vld [vmem:[%s131] sm:$0x1]
        %s133 = scalar_select %p126, 1, 0
        %v134 = vstv %s133
        %vm135 = vcmp.eq.s32.totalorder %v134, 1
        %v136 = vsel %vm135, %v132, 0.0
        %137 = vst [vmem:[%s120] sm:$0x1] %v136
        %s138 = sadd.s32 %s121, 1
        %s139 = sld [smem:[#allocation3 + %s138]]
        %p140 = scmp.ge.s32.totalorder %s139, 0
        %p141 = scmp.lt.s32.totalorder %s139, 64
        %p142 = pnand %p140, %p141
        %p143 = pneg %p142
        %p144 = scmp.gt.s32.totalorder %s139, 0
        %s145 = scalar_select %p144, %s139, 0
        %p146 = scmp.lt.s32.totalorder %s145, 63
        %s147 = scalar_select %p146, %s145, 63
        %s148 = scalar_lea.vmem [#allocation4], %s147
        %v149 = vld [vmem:[%s148] sm:$0x1]
        %s150 = scalar_select %p143, 1, 0
        %v151 = vstv %s150
        %vm152 = vcmp.eq.s32.totalorder %v151, 1
        %v153 = vsel %vm152, %v149, 0.0
        %154 = vst [vmem:[%s120 + $0x1] sm:$0x1] %v153
        %s155 = sadd.s32 %s121, 2
        %s156 = sld [smem:[#allocation3 + %s155]]
        %p157 = scmp.ge.s32.totalorder %s156, 0
        %p158 = scmp.lt.s32.totalorder %s156, 64
        %p159 = pnand %p157, %p158
        %p160 = pneg %p159
        %p161 = scmp.gt.s32.totalorder %s156, 0
        %s162 = scalar_select %p161, %s156, 0
        %p163 = scmp.lt.s32.totalorder %s162, 63
        %s164 = scalar_select %p163, %s162, 63
        %s165 = scalar_lea.vmem [#allocation4], %s164
        %v166 = vld [vmem:[%s165] sm:$0x1]
        %s167 = scalar_select %p160, 1, 0
        %v168 = vstv %s167
        %vm169 = vcmp.eq.s32.totalorder %v168, 1
        %v170 = vsel %vm169, %v166, 0.0
        %171 = vst [vmem:[%s120 + $0x2] sm:$0x1] %v170
        %s172 = sadd.s32 %s121, 3
        %s173 = sld [smem:[#allocation3 + %s172]]
        %p174 = scmp.ge.s32.totalorder %s173, 0
        %p175 = scmp.lt.s32.totalorder %s173, 64
        %p176 = pnand %p174, %p175
        %p177 = pneg %p176
        %p178 = scmp.gt.s32.totalorder %s173, 0
        %s179 = scalar_select %p178, %s173, 0
        %p180 = scmp.lt.s32.totalorder %s179, 63
        %s181 = scalar_select %p180, %s179, 63
        %s182 = scalar_lea.vmem [#allocation4], %s181
        %v183 = vld [vmem:[%s182] sm:$0x1]
        %s184 = scalar_select %p177, 1, 0
        %v185 = vstv %s184
        %vm186 = vcmp.eq.s32.totalorder %v185, 1
        %v187 = vsel %vm186, %v183, 0.0
        %188 = vst [vmem:[%s120 + $0x3] sm:$0x1] %v187
        %s189 = sadd.s32 %s121, 4
        %s190 = sld [smem:[#allocation3 + %s189]]
        %p191 = scmp.ge.s32.totalorder %s190, 0
        %p192 = scmp.lt.s32.totalorder %s190, 64
        %p193 = pnand %p191, %p192
        %p194 = pneg %p193
        %p195 = scmp.gt.s32.totalorder %s190, 0
        %s196 = scalar_select %p195, %s190, 0
        %p197 = scmp.lt.s32.totalorder %s196, 63
        %s198 = scalar_select %p197, %s196, 63
        %s199 = scalar_lea.vmem [#allocation4], %s198
        %v200 = vld [vmem:[%s199] sm:$0x1]
        %s201 = scalar_select %p194, 1, 0
        %v202 = vstv %s201
        %vm203 = vcmp.eq.s32.totalorder %v202, 1
        %v204 = vsel %vm203, %v200, 0.0
        %205 = vst [vmem:[%s120 + $0x4] sm:$0x1] %v204
        %s206 = sadd.s32 %s121, 5
        %s207 = sld [smem:[#allocation3 + %s206]]
        %p208 = scmp.ge.s32.totalorder %s207, 0
        %p209 = scmp.lt.s32.totalorder %s207, 64
        %p210 = pnand %p208, %p209
        %p211 = pneg %p210
        %p212 = scmp.gt.s32.totalorder %s207, 0
        %s213 = scalar_select %p212, %s207, 0
        %p214 = scmp.lt.s32.totalorder %s213, 63
        %s215 = scalar_select %p214, %s213, 63
        %s216 = scalar_lea.vmem [#allocation4], %s215
        %v217 = vld [vmem:[%s216] sm:$0x1]
        %s218 = scalar_select %p211, 1, 0
        %v219 = vstv %s218
        %vm220 = vcmp.eq.s32.totalorder %v219, 1
        %v221 = vsel %vm220, %v217, 0.0
        %222 = vst [vmem:[%s120 + $0x5] sm:$0x1] %v221
        %s223 = sadd.s32 %s121, 6
        %s224 = sld [smem:[#allocation3 + %s223]]
        %p225 = scmp.ge.s32.totalorder %s224, 0
        %p226 = scmp.lt.s32.totalorder %s224, 64
        %p227 = pnand %p225, %p226
        %p228 = pneg %p227
        %p229 = scmp.gt.s32.totalorder %s224, 0
        %s230 = scalar_select %p229, %s224, 0
        %p231 = scmp.lt.s32.totalorder %s230, 63
        %s232 = scalar_select %p231, %s230, 63
        %s233 = scalar_lea.vmem [#allocation4], %s232
        %v234 = vld [vmem:[%s233] sm:$0x1]
        %s235 = scalar_select %p228, 1, 0
        %v236 = vstv %s235
        %vm237 = vcmp.eq.s32.totalorder %v236, 1
        %v238 = vsel %vm237, %v234, 0.0
        %239 = vst [vmem:[%s120 + $0x6] sm:$0x1] %v238
        %s240 = sadd.s32 %s121, 7
        %s241 = sld [smem:[#allocation3 + %s240]]
        %p242 = scmp.ge.s32.totalorder %s241, 0
        %p243 = scmp.lt.s32.totalorder %s241, 64
        %p244 = pnand %p242, %p243
        %p245 = pneg %p244
        %p246 = scmp.gt.s32.totalorder %s241, 0
        %s247 = scalar_select %p246, %s241, 0
        %p248 = scmp.lt.s32.totalorder %s247, 63
        %s249 = scalar_select %p248, %s247, 63
        %s250 = scalar_lea.vmem [#allocation4], %s249
        %v251 = vld [vmem:[%s250] sm:$0x1]
        %s252 = scalar_select %p245, 1, 0
        %v253 = vstv %s252
        %vm254 = vcmp.eq.s32.totalorder %v253, 1
        %v255 = vsel %vm254, %v251, 0.0
        %256 = vst [vmem:[%s120 + $0x7] sm:$0x1] %v255
        %s257 = sand.u32 %s54, 1
        %s258 = scalar_lea.sflag [#allocation6], %s257
        %s259 = sand.u32 %s54, 1
        %s260 = smul.addr %s259, 8
        %s261 = scalar_lea.vmem [#allocation7], %s260
        // Predicated region
        $region29: #{tpu_custom_call.1} parent=23 // pred_check
          %p262 = pneg %p64
        $region30: #{tpu_custom_call.1} parent=23 // pred_check_branch
          %264 = sbr.rel (%p262) target = $region32
        $region31: #{tpu_custom_call.1} parent=23 // pred_region
          %266 = vsyncadd %s258, 0
          %s267 = smul.addr %s25, 8
          %s268 = scalar_lea.hbm %s2, %s267
          %s270 = sshll.u32 %s261, 4
          %s271 = int_to_ptr.vmem [resolvable:$true] %s270
          %s272 = sshll.u32 %s268, 4
          %s273 = int_to_ptr.hbm [resolvable:$true] %s272
          %275 = dma.vmem_to_hbm [thread:$0]  %s271, 128, %s273, %s258
        $region32: #{tpu_custom_call.1} parent=23 // pred_fallthru
          _
      $region24: #{tpu_custom_call.1} parent=5 // pred_fallthru
        _
      %p276 = scmp.le.s32.totalorder 2, %s20
      // Predicated region
      $region33: #{tpu_custom_call.1} parent=5 // pred_check
        %p277 = pneg %p276
      $region34: #{tpu_custom_call.1} parent=5 // pred_check_branch
        %279 = sbr.rel (%p277) target = $region36
      $region35: #{tpu_custom_call.1} parent=5 // pred_region
        %s280 = ssub.s32 %s20, 2
        // Predicated region
        $region37: #{tpu_custom_call.1} parent=35 // pred_check
          %p281 = pneg %p70
        $region38: #{tpu_custom_call.1} parent=35 // pred_check_branch
          %283 = sbr.rel (%p281) target = $region40
        $region39: #{tpu_custom_call.1} parent=35 // pred_region
          %s284 = sand.u32 %s55, 1
          %s285 = scalar_lea.sflag [#allocation6], %s284
          %s286 = sand.u32 %s55, 1
          %s287 = smul.addr %s286, 8
          %s288 = scalar_lea.vmem [#allocation7], %s287
          %290 = dma.done %s285, 128
        $region40: #{tpu_custom_call.1} parent=35 // pred_fallthru
          _
      $region36: #{tpu_custom_call.1} parent=5 // pred_fallthru
        _
    $region6: #{tpu_custom_call.1} parent=1 // loop_footer
      %s24 = sadd.s32 1, %s20
    $region7: #{tpu_custom_call.1} parent=1 // loop_footer_branch
      %19 = sbr.rel target = $region3
    $region8: #{tpu_custom_call.1} parent=1 // loop_exit
      _
    %291 = vsyncpa [#allocation5], 1
    %s292 = scalar_lea.sflag [#allocation5], 1
    %293 = vsyncpa %s292, 1
    %294 = vsyncpa [#allocation6], 1
    %s295 = scalar_lea.sflag [#allocation6], 1
    %296 = vsyncpa %s295, 1

</llo_original>
